<compile_context>
chip_gen: v7x
topology: tpu7x:2x2x1
jax: 0.10.0
libtpu: 0.0.40
codegen_flags: <defaults>
</compile_context>

<pallas_src>
import math

import jax
import jax.numpy as jnp
from jax.experimental import pallas as pl
from jax.experimental.pallas import tpu as pltpu

# ----------------------------- hyperparameters ------------------------------
N = 2            # batch
H = W = 16       # spatial (real model resizes to 224x224; toy size here)
HW = H * W
N_PIX = N * HW   # 512 pixels total -> lane axis inside the kernel
C_IN = 1         # cnn1 input channels
C_MID = 3        # cnn1 output channels (mimics RGB for the backbone)
F_FEAT = 64      # backbone feature dim (stand-in for resnet's 512)
H_DIMS = 32      # h_dims
Y_DIMS = 3       # len(label_names)
EPS = 1e-5

LANE = 128       # lane-dense padded "batch" axis inside the kernel
OUT_ROWS = 8     # Y_DIMS padded up to one sublane tile
SLAB_COLS = 8    # packed column-slab width
COL_WF = 0       # slab[:, 0:3]      backbone 1x1 conv weight (one column / channel)
COL_BF = 3       # slab[:, 3]        backbone conv bias
COL_BC = 4       # slab[:H_DIMS, 4]  folded (fc_back -> w1 -> w2) bias
COL_B3 = 5       # slab[:Y_DIMS, 5]  folded (BN1d -> w3) bias


def _gelu_tanh(x):
    # TODO(synk): PyTorch nn.GELU() defaults to the exact erf formulation; the
    # tanh approximation is used here (erf lowering is not guaranteed in Mosaic).
    c = math.sqrt(2.0 / math.pi)
    return 0.5 * x * (1.0 + jnp.tanh(c * (x + 0.044715 * x * x * x)))


# ------------------------------- fused kernel --------------------------------
def _fused_kernel(ab_ref, x_ref, slab_ref, wcT_ref, w3fT_ref, out_ref):
    """Whole forward pass, transposed (feature x pixel / feature x lane) layout.

    ab_ref   : SMEM (1, 8)        a[0:3], b[0:3] = folded conv1x1+BN2d scale/shift
    x_ref    : (1, N_PIX)         single-channel pixels, lane-dense
    slab_ref : (F_FEAT, 8)        packed per-feature column vectors (see COL_*)
    wcT_ref  : (H_DIMS, F_FEAT)   folded (fc_back -> w1 -> w2) weight, column form
    w3fT_ref : (OUT_ROWS, H_DIMS) folded (BN1d -> w3) weight, rows padded to 8
    out_ref  : (OUT_ROWS, LANE)   padded output tile; [y, n] valid for y<Y, n<N
    """
    x = x_ref[...]                                                   # (1, P)
    slab = slab_ref[...]                                             # (F, 8)

    # cnn1: Conv2d(1,3,k=1)+BN2d(eval)+ReLU folded to per-channel affine, then
    # the backbone stand-in 1x1 conv 3->F as three VPU broadcast FMAs (no K=3
    # MXU matmul).
    feat = jnp.zeros((F_FEAT, N_PIX), dtype=jnp.float32)
    for c in range(C_MID):
        a_c = ab_ref[0, c]                                           # scalar
        b_c = ab_ref[0, C_MID + c]                                   # scalar
        h3_c = jnp.maximum(a_c * x + b_c, 0.0)                       # (1, P)
        feat = feat + slab[:, COL_WF + c:COL_WF + c + 1] * h3_c      # (F,1)*(1,P)
    feat = jnp.maximum(feat + slab[:, COL_BF:COL_BF + 1], 0.0)       # (F, P)

    # Global average pool as an MXU matmul against an iota-generated
    # block-diagonal pool matrix; columns >= N are zero -> lanes >= N carry
    # padding that is sliced away in the wrapper.
    row = jax.lax.broadcasted_iota(jnp.int32, (N_PIX, LANE), 0)
    col = jax.lax.broadcasted_iota(jnp.int32, (N_PIX, LANE), 1)
    sel = (row >= col * HW) & (row < (col + 1) * HW)
    poolmat = jnp.where(sel, 1.0 / HW, 0.0).astype(jnp.float32)      # (P, LANE)
    pooled = jnp.dot(feat, poolmat,
                     preferred_element_type=jnp.float32)             # (F, LANE)

    # Head: folded (fc_back -> w1 -> w2) linear, GELU, BN1d folded into w3.
    z = jnp.dot(wcT_ref[...], pooled,
                preferred_element_type=jnp.float32) \
        + slab[:H_DIMS, COL_BC:COL_BC + 1]                           # (H, LANE)
    g = _gelu_tanh(z)
    # Dropout = identity in eval mode.
    out_ref[...] = jnp.dot(w3fT_ref[...], g,
                           preferred_element_type=jnp.float32) \
        + slab[:OUT_ROWS, COL_B3:COL_B3 + 1]                         # (8, LANE)


# ------------------------- parameter folding (glue) ---------------------------
def _fold_params(p):
    """Exact algebraic folds (plain-JAX glue, outside the kernel)."""
    # Conv2d(1,3,k=1) + BatchNorm2d(3) eval -> per-channel affine a*x + b.
    inv2d = 1.0 / jnp.sqrt(p["bn2d_v"] + EPS)
    a = p["conv1_w"][:, 0, 0, 0] * p["bn2d_g"] * inv2d                      # (3,)
    b = (p["conv1_b"] - p["bn2d_m"]) * p["bn2d_g"] * inv2d + p["bn2d_b"]    # (3,)

    # fc_back (F->H), w1 (H->H), w2 (H->H) have no nonlinearity between them:
    # collapse to one linear.  Column form: z_T = WcT @ pooled_T + bc.
    WcT = p["w2"] @ p["w1"] @ p["fc_back_w"]                                # (H, F)
    bc = p["w2"] @ (p["w1"] @ p["fc_back_b"] + p["b1"]) + p["b2"]           # (H,)

    # BatchNorm1d(H) eval is an affine followed by Linear(H, Y): fold into w3/b3.
    inv1d = 1.0 / jnp.sqrt(p["bn1d_v"] + EPS)
    s = p["bn1d_g"] * inv1d
    t = p["bn1d_b"] - p["bn1d_m"] * s
    w3f = p["w3"] * s[None, :]                                              # (Y, H)
    b3f = p["b3"] + p["w3"] @ t                                             # (Y,)
    W3fT = jnp.zeros((OUT_ROWS, H_DIMS), jnp.float32).at[:Y_DIMS, :].set(w3f)

    # Pack the tiny per-channel scalars into SMEM and the per-feature vectors
    # into one VMEM column slab (one DMA instead of many).
    ab = jnp.zeros((1, 8), jnp.float32)
    ab = ab.at[0, :C_MID].set(a)
    ab = ab.at[0, C_MID:2 * C_MID].set(b)

    slab = jnp.zeros((F_FEAT, SLAB_COLS), jnp.float32)
    slab = slab.at[:, COL_WF:COL_WF + C_MID].set(p["feat_w"])               # (F, 3)
    slab = slab.at[:, COL_BF].set(p["feat_b"])                              # (F,)
    slab = slab.at[:H_DIMS, COL_BC].set(bc)
    slab = slab.at[:Y_DIMS, COL_B3].set(b3f)
    return ab, slab, WcT, W3fT


def pretrained_cnn_forward(x_nchw, p):
    """Full PretrainedCNN.forward via one fused Pallas kernel."""
    ab, slab, WcT, W3fT = _fold_params(p)
    x_row = x_nchw.astype(jnp.float32).reshape(1, N_PIX)   # pixels on lanes

    out_pad = pl.pallas_call(
        _fused_kernel,
        out_shape=jax.ShapeDtypeStruct((OUT_ROWS, LANE), jnp.float32),
        grid=(1,),
        in_specs=[
            pl.BlockSpec(memory_space=pltpu.MemorySpace.SMEM),        # ab scalars
            pl.BlockSpec((1, N_PIX), lambda i: (0, 0)),               # x
            pl.BlockSpec((F_FEAT, SLAB_COLS), lambda i: (0, 0)),      # slab
            pl.BlockSpec((H_DIMS, F_FEAT), lambda i: (0, 0)),         # WcT
            pl.BlockSpec((OUT_ROWS, H_DIMS), lambda i: (0, 0)),       # W3fT
        ],
        out_specs=pl.BlockSpec((OUT_ROWS, LANE), lambda i: (0, 0)),
        compiler_params=pltpu.CompilerParams(
            dimension_semantics=("arbitrary",)),
    )(ab, x_row, slab, WcT, W3fT)

    # Slice the valid (Y, N) corner of the lane-dense tile and transpose to (N, Y).
    return out_pad[:Y_DIMS, :N].T


# --------------------------- reference (plain JAX) ---------------------------
def reference_forward(x_nchw, p):
    x = x_nchw[:, 0].astype(jnp.float32)                         # (N, H, W)
    w = p["conv1_w"][:, 0, 0, 0]
    h = x[:, None] * w[None, :, None, None] + p["conv1_b"][None, :, None, None]
    h = ((h - p["bn2d_m"][None, :, None, None])
         / jnp.sqrt(p["bn2d_v"] + EPS)[None, :, None, None]
         * p["bn2d_g"][None, :, None, None] + p["bn2d_b"][None, :, None, None])
    h = jnp.maximum(h, 0.0)                                      # (N, 3, H, W)
    feat = jnp.einsum("nchw,fc->nfhw", h, p["feat_w"]) \
        + p["feat_b"][None, :, None, None]
    feat = jnp.maximum(feat, 0.0)                                # (N, F, H, W)
    pooled = feat.mean(axis=(2, 3))                              # (N, F)
    z = pooled @ p["fc_back_w"].T + p["fc_back_b"]               # (N, H_DIMS)
    y = z @ p["w1"].T + p["b1"]
    y = y @ p["w2"].T + p["b2"]
    y = _gelu_tanh(y)
    y = ((y - p["bn1d_m"]) / jnp.sqrt(p["bn1d_v"] + EPS)
         * p["bn1d_g"] + p["bn1d_b"])
    return y @ p["w3"].T + p["b3"]                               # (N, Y_DIMS)


# ------------------------------ parameter init -------------------------------
def init_params(key):
    ks = jax.random.split(key, 20)
    f32 = jnp.float32
    p = {}
    # cnn1
    p["conv1_w"] = jax.random.normal(ks[0], (C_MID, C_IN, 1, 1), f32) * 0.5
    p["conv1_b"] = jax.random.normal(ks[1], (C_MID,), f32) * 0.1
    p["bn2d_g"] = 1.0 + 0.1 * jax.random.normal(ks[2], (C_MID,), f32)
    p["bn2d_b"] = 0.1 * jax.random.normal(ks[3], (C_MID,), f32)
    p["bn2d_m"] = 0.1 * jax.random.normal(ks[4], (C_MID,), f32)
    p["bn2d_v"] = jax.random.uniform(ks[5], (C_MID,), f32, 0.5, 1.5)
    # backbone stand-in + replaced fc (Linear(F, h_dims))
    p["feat_w"] = jax.random.normal(ks[6], (F_FEAT, C_MID), f32) / math.sqrt(C_MID)
    p["feat_b"] = 0.1 * jax.random.normal(ks[7], (F_FEAT,), f32)
    p["fc_back_w"] = jax.random.normal(ks[8], (H_DIMS, F_FEAT), f32) / math.sqrt(F_FEAT)
    p["fc_back_b"] = 0.1 * jax.random.normal(ks[9], (H_DIMS,), f32)
    # head (n_layers=2, batch_norm=True)
    p["w1"] = jax.random.normal(ks[10], (H_DIMS, H_DIMS), f32) / math.sqrt(H_DIMS)
    p["b1"] = 0.1 * jax.random.normal(ks[11], (H_DIMS,), f32)
    p["w2"] = jax.random.normal(ks[12], (H_DIMS, H_DIMS), f32) / math.sqrt(H_DIMS)
    p["b2"] = 0.1 * jax.random.normal(ks[13], (H_DIMS,), f32)
    p["bn1d_g"] = 1.0 + 0.1 * jax.random.normal(ks[14], (H_DIMS,), f32)
    p["bn1d_b"] = 0.1 * jax.random.normal(ks[15], (H_DIMS,), f32)
    p["bn1d_m"] = 0.1 * jax.random.normal(ks[16], (H_DIMS,), f32)
    p["bn1d_v"] = jax.random.uniform(ks[17], (H_DIMS,), f32, 0.5, 1.5)
    p["w3"] = jax.random.normal(ks[18], (Y_DIMS, H_DIMS), f32) / math.sqrt(H_DIMS)
    p["b3"] = 0.1 * jax.random.normal(ks[19], (Y_DIMS,), f32)
    return p


# ----------------------------------- main ------------------------------------
if __name__ == "__main__":
    key = jax.random.PRNGKey(0)
    kx, kp = jax.random.split(key)
    x = jax.random.normal(kx, (N, C_IN, H, W), dtype=jnp.float32)  # NCHW input
    params = init_params(kp)

    fwd = jax.jit(pretrained_cnn_forward)
    out = jax.block_until_ready(fwd(x, params))

    ref = reference_forward(x, params)
    assert out.shape == (N, Y_DIMS), out.shape
    assert jnp.allclose(out, ref, atol=2e-4, rtol=2e-4), (out, ref)
    print("KERNEL_OK")
</pallas_src>

<mosaic_0001>
module attributes {stable_mosaic.version = 11 : i64} {
  func.func @_fused_kernel(%arg0: i32, %arg1: memref<1x8xf32, #tpu.memory_space<smem>>, %arg2: memref<1x512xf32, #tpu.memory_space<vmem>>, %arg3: memref<64x8xf32, #tpu.memory_space<vmem>>, %arg4: memref<32x64xf32, #tpu.memory_space<vmem>>, %arg5: memref<8x32xf32, #tpu.memory_space<vmem>>, %arg6: memref<8x128xf32, #tpu.memory_space<vmem>>) attributes {dimension_semantics = [#tpu.dimension_semantics<arbitrary>], iteration_bounds = array<i64: 1>, scalar_prefetch = 0 : i64, scratch_operands = 0 : i64, tpu.core_type = #tpu.core_type<tc>, window_params = [{transform_indices = @transform_0, window_bounds = array<i64: 1, 8>}, {pipeline_mode = #tpu.pipeline_mode<synchronous>, transform_indices = @transform_1, window_bounds = array<i64: 1, 512>}, {pipeline_mode = #tpu.pipeline_mode<synchronous>, transform_indices = @transform_2, window_bounds = array<i64: 64, 8>}, {pipeline_mode = #tpu.pipeline_mode<synchronous>, transform_indices = @transform_3, window_bounds = array<i64: 32, 64>}, {pipeline_mode = #tpu.pipeline_mode<synchronous>, transform_indices = @transform_4, window_bounds = array<i64: 8, 32>}, {pipeline_mode = #tpu.pipeline_mode<synchronous>, transform_indices = @transform_5, window_bounds = array<i64: 8, 128>}]} {
    %c0 = arith.constant 0 : index
    %c0_0 = arith.constant 0 : index
    %0 = vector.load %arg2[%c0, %c0_0] : memref<1x512xf32, #tpu.memory_space<vmem>>, vector<1x512xf32>
    %c0_1 = arith.constant 0 : index
    %c0_2 = arith.constant 0 : index
    %1 = vector.load %arg3[%c0_1, %c0_2] : memref<64x8xf32, #tpu.memory_space<vmem>>, vector<64x8xf32>
    %cst = arith.constant 0.000000e+00 : f32
    %2 = vector.broadcast %cst : f32 to vector<64x512xf32>
    %c0_3 = arith.constant 0 : index
    %c0_4 = arith.constant 0 : index
    %3 = memref.load %arg1[%c0_3, %c0_4] : memref<1x8xf32, #tpu.memory_space<smem>>
    %c0_5 = arith.constant 0 : index
    %c3 = arith.constant 3 : index
    %4 = memref.load %arg1[%c0_5, %c3] : memref<1x8xf32, #tpu.memory_space<smem>>
    %5 = vector.broadcast %3 : f32 to vector<1x512xf32>
    %6 = arith.mulf %5, %0 : vector<1x512xf32>
    %7 = vector.broadcast %4 : f32 to vector<1x512xf32>
    %8 = arith.addf %6, %7 : vector<1x512xf32>
    %cst_6 = arith.constant 0.000000e+00 : f32
    %9 = vector.broadcast %cst_6 : f32 to vector<1x512xf32>
    %10 = arith.maximumf %8, %9 : vector<1x512xf32>
    %11 = vector.extract_strided_slice %1 {offsets = [0, 0], sizes = [64, 1], strides = [1, 1]} : vector<64x8xf32> to vector<64x1xf32>
    %12 = vector.broadcast %11 : vector<64x1xf32> to vector<64x512xf32>
    %13 = vector.broadcast %10 : vector<1x512xf32> to vector<64x512xf32>
    %14 = arith.mulf %12, %13 : vector<64x512xf32>
    %15 = arith.addf %2, %14 : vector<64x512xf32>
    %c0_7 = arith.constant 0 : index
    %c1 = arith.constant 1 : index
    %16 = memref.load %arg1[%c0_7, %c1] : memref<1x8xf32, #tpu.memory_space<smem>>
    %c0_8 = arith.constant 0 : index
    %c4 = arith.constant 4 : index
    %17 = memref.load %arg1[%c0_8, %c4] : memref<1x8xf32, #tpu.memory_space<smem>>
    %18 = vector.broadcast %16 : f32 to vector<1x512xf32>
    %19 = arith.mulf %18, %0 : vector<1x512xf32>
    %20 = vector.broadcast %17 : f32 to vector<1x512xf32>
    %21 = arith.addf %19, %20 : vector<1x512xf32>
    %cst_9 = arith.constant 0.000000e+00 : f32
    %22 = vector.broadcast %cst_9 : f32 to vector<1x512xf32>
    %23 = arith.maximumf %21, %22 : vector<1x512xf32>
    %24 = vector.extract_strided_slice %1 {offsets = [0, 1], sizes = [64, 1], strides = [1, 1]} : vector<64x8xf32> to vector<64x1xf32>
    %25 = vector.broadcast %24 : vector<64x1xf32> to vector<64x512xf32>
    %26 = vector.broadcast %23 : vector<1x512xf32> to vector<64x512xf32>
    %27 = arith.mulf %25, %26 : vector<64x512xf32>
    %28 = arith.addf %15, %27 : vector<64x512xf32>
    %c0_10 = arith.constant 0 : index
    %c2 = arith.constant 2 : index
    %29 = memref.load %arg1[%c0_10, %c2] : memref<1x8xf32, #tpu.memory_space<smem>>
    %c0_11 = arith.constant 0 : index
    %c5 = arith.constant 5 : index
    %30 = memref.load %arg1[%c0_11, %c5] : memref<1x8xf32, #tpu.memory_space<smem>>
    %31 = vector.broadcast %29 : f32 to vector<1x512xf32>
    %32 = arith.mulf %31, %0 : vector<1x512xf32>
    %33 = vector.broadcast %30 : f32 to vector<1x512xf32>
    %34 = arith.addf %32, %33 : vector<1x512xf32>
    %cst_12 = arith.constant 0.000000e+00 : f32
    %35 = vector.broadcast %cst_12 : f32 to vector<1x512xf32>
    %36 = arith.maximumf %34, %35 : vector<1x512xf32>
    %37 = vector.extract_strided_slice %1 {offsets = [0, 2], sizes = [64, 1], strides = [1, 1]} : vector<64x8xf32> to vector<64x1xf32>
    %38 = vector.broadcast %37 : vector<64x1xf32> to vector<64x512xf32>
    %39 = vector.broadcast %36 : vector<1x512xf32> to vector<64x512xf32>
    %40 = arith.mulf %38, %39 : vector<64x512xf32>
    %41 = arith.addf %28, %40 : vector<64x512xf32>
    %42 = vector.extract_strided_slice %1 {offsets = [0, 3], sizes = [64, 1], strides = [1, 1]} : vector<64x8xf32> to vector<64x1xf32>
    %43 = vector.broadcast %42 : vector<64x1xf32> to vector<64x512xf32>
    %44 = arith.addf %41, %43 : vector<64x512xf32>
    %cst_13 = arith.constant 0.000000e+00 : f32
    %45 = vector.broadcast %cst_13 : f32 to vector<64x512xf32>
    %46 = arith.maximumf %44, %45 : vector<64x512xf32>
    %47 = tpu.iota {dimensions = array<i32: 0>} : vector<512x128xi32>
    %48 = tpu.iota {dimensions = array<i32: 1>} : vector<512x128xi32>
    %c256_i32 = arith.constant 256 : i32
    %49 = vector.broadcast %c256_i32 : i32 to vector<512x128xi32>
    %50 = arith.muli %48, %49 : vector<512x128xi32>
    %51 = arith.cmpi sge, %47, %50 : vector<512x128xi32>
    %c1_i32 = arith.constant 1 : i32
    %52 = vector.broadcast %c1_i32 : i32 to vector<512x128xi32>
    %53 = arith.addi %48, %52 : vector<512x128xi32>
    %c256_i32_14 = arith.constant 256 : i32
    %54 = vector.broadcast %c256_i32_14 : i32 to vector<512x128xi32>
    %55 = arith.muli %53, %54 : vector<512x128xi32>
    %56 = arith.cmpi slt, %47, %55 : vector<512x128xi32>
    %57 = arith.andi %51, %56 : vector<512x128xi1>
    %cst_15 = arith.constant 3.906250e-03 : f32
    %cst_16 = arith.constant 0.000000e+00 : f32
    %58 = vector.broadcast %cst_15 : f32 to vector<512x128xf32>
    %59 = vector.broadcast %cst_16 : f32 to vector<512x128xf32>
    %60 = arith.select %57, %58, %59 : vector<512x128xi1>, vector<512x128xf32>
    %cst_17 = arith.constant dense<0.000000e+00> : vector<64x128xf32>
    %61 = tpu.matmul %46, %60, %cst_17 {dimension_numbers = #tpu.dot_dimension_numbers<[1], [0], [0], [1], [0, 0, 1, 1], [], []>} : vector<64x512xf32>, vector<512x128xf32>, vector<64x128xf32> -> vector<64x128xf32>
    %c0_18 = arith.constant 0 : index
    %c0_19 = arith.constant 0 : index
    %62 = vector.load %arg4[%c0_18, %c0_19] : memref<32x64xf32, #tpu.memory_space<vmem>>, vector<32x64xf32>
    %cst_20 = arith.constant dense<0.000000e+00> : vector<32x128xf32>
    %63 = tpu.matmul %62, %61, %cst_20 {dimension_numbers = #tpu.dot_dimension_numbers<[1], [0], [0], [1], [0, 0, 1, 1], [], []>} : vector<32x64xf32>, vector<64x128xf32>, vector<32x128xf32> -> vector<32x128xf32>
    %64 = vector.extract_strided_slice %1 {offsets = [0, 4], sizes = [32, 1], strides = [1, 1]} : vector<64x8xf32> to vector<32x1xf32>
    %65 = vector.broadcast %64 : vector<32x1xf32> to vector<32x128xf32>
    %66 = arith.addf %63, %65 : vector<32x128xf32>
    %cst_21 = arith.constant 5.000000e-01 : f32
    %67 = vector.broadcast %cst_21 : f32 to vector<32x128xf32>
    %68 = arith.mulf %67, %66 : vector<32x128xf32>
    %cst_22 = arith.constant 4.471500e-02 : f32
    %69 = vector.broadcast %cst_22 : f32 to vector<32x128xf32>
    %70 = arith.mulf %69, %66 : vector<32x128xf32>
    %71 = arith.mulf %70, %66 : vector<32x128xf32>
    %72 = arith.mulf %71, %66 : vector<32x128xf32>
    %73 = arith.addf %66, %72 : vector<32x128xf32>
    %cst_23 = arith.constant 0.797884583 : f32
    %74 = vector.broadcast %cst_23 : f32 to vector<32x128xf32>
    %75 = arith.mulf %74, %73 : vector<32x128xf32>
    %76 = math.tanh %75 : vector<32x128xf32>
    %cst_24 = arith.constant 1.000000e+00 : f32
    %77 = vector.broadcast %cst_24 : f32 to vector<32x128xf32>
    %78 = arith.addf %77, %76 : vector<32x128xf32>
    %79 = arith.mulf %68, %78 : vector<32x128xf32>
    %c0_25 = arith.constant 0 : index
    %c0_26 = arith.constant 0 : index
    %80 = vector.load %arg5[%c0_25, %c0_26] : memref<8x32xf32, #tpu.memory_space<vmem>>, vector<8x32xf32>
    %cst_27 = arith.constant dense<0.000000e+00> : vector<8x128xf32>
    %81 = tpu.matmul %80, %79, %cst_27 {dimension_numbers = #tpu.dot_dimension_numbers<[1], [0], [0], [1], [0, 0, 1, 1], [], []>} : vector<8x32xf32>, vector<32x128xf32>, vector<8x128xf32> -> vector<8x128xf32>
    %82 = vector.extract_strided_slice %1 {offsets = [0, 5], sizes = [8, 1], strides = [1, 1]} : vector<64x8xf32> to vector<8x1xf32>
    %83 = vector.broadcast %82 : vector<8x1xf32> to vector<8x128xf32>
    %84 = arith.addf %81, %83 : vector<8x128xf32>
    %c0_28 = arith.constant 0 : index
    %c0_29 = arith.constant 0 : index
    %85 = vector.load %arg6[%c0_28, %c0_29] : memref<8x128xf32, #tpu.memory_space<vmem>>, vector<8x128xf32>
    tpu.vector_store %arg6[%c0_28, %c0_29], %84 {strides = array<i32>} : memref<8x128xf32, #tpu.memory_space<vmem>>, vector<8x128xf32>,
    return
  }
  func.func @transform_0(%arg0: i32) -> (i32, i32) {
    %c0_i32 = arith.constant 0 : i32
    %c0_i32_0 = arith.constant 0 : i32
    %c0_i32_1 = arith.constant 0 : i32
    return %c0_i32, %c0_i32_0 : i32, i32
  }
  func.func @transform_1(%arg0: i32) -> (i32, i32) {
    %c0_i32 = arith.constant 0 : i32
    %c0_i32_0 = arith.constant 0 : i32
    %c0_i32_1 = arith.constant 0 : i32
    return %c0_i32, %c0_i32_0 : i32, i32
  }
  func.func @transform_2(%arg0: i32) -> (i32, i32) {
    %c0_i32 = arith.constant 0 : i32
    %c0_i32_0 = arith.constant 0 : i32
    %c0_i32_1 = arith.constant 0 : i32
    return %c0_i32, %c0_i32_0 : i32, i32
  }
  func.func @transform_3(%arg0: i32) -> (i32, i32) {
    %c0_i32 = arith.constant 0 : i32
    %c0_i32_0 = arith.constant 0 : i32
    %c0_i32_1 = arith.constant 0 : i32
    return %c0_i32, %c0_i32_0 : i32, i32
  }
  func.func @transform_4(%arg0: i32) -> (i32, i32) {
    %c0_i32 = arith.constant 0 : i32
    %c0_i32_0 = arith.constant 0 : i32
    %c0_i32_1 = arith.constant 0 : i32
    return %c0_i32, %c0_i32_0 : i32, i32
  }
  func.func @transform_5(%arg0: i32) -> (i32, i32) {
    %c0_i32 = arith.constant 0 : i32
    %c0_i32_0 = arith.constant 0 : i32
    %c0_i32_1 = arith.constant 0 : i32
    return %c0_i32, %c0_i32_0 : i32, i32
  }
}

</mosaic_0001>

<llo_original>
// kernel: pretrained_cnn_forward.1
$region0: #{pretrained_cnn_forward.1}
  #allocation0 [shape = 'u32[]', space=smem, size = 0x4, offset = 0x4, fixed_abs, tag = 'smem constant byte address 0x4 - core index']
  #allocation1 [shape = 'u32[144,128]{1,0:T(1,128)}', space=vmem, size = 0x12000, scoped, tag = 'internal scratch']
  %s0 = inlined_call_operand.vmem [shape: f32[1,8], index: 0, kind: input, shape index: {}]
  %s1 = inlined_call_operand.vmem [shape: f32[1,512], index: 1, kind: input, shape index: {}]
  %s2 = inlined_call_operand.vmem [shape: f32[64,8], index: 2, kind: input, shape index: {}]
  %s3 = inlined_call_operand.vmem [shape: f32[32,64], index: 3, kind: input, shape index: {}]
  %s4 = inlined_call_operand.vmem [shape: f32[8,32], index: 4, kind: input, shape index: {}]
  %s5 = inlined_call_operand.vmem [shape: f32[8,128], index: 5, kind: output, shape index: {}]
  %s6 = sld [smem:[#allocation0]]
  $region34: #{pretrained_cnn_forward.1} parent=0
    _
  %s8 = ssub.s32 1, %s6
  %s9 = scalar_select 0, %s8, %s6
  $region1: #{pretrained_cnn_forward.1} parent=0
    #allocation2 [shape = 'u8[512]{0}', space=smem, size = 0x200, scoped, tag = 'input window, operand 0, single buffered']
    #allocation3 [shape = 's32[1]{0}', space=sflag, size = 0x4, scoped, tag = 'scoped memory for pretrained_cnn_forward.1']
    %10 = vsyncpa [#allocation3], 0
    // Predicated region
    $region2: #{pretrained_cnn_forward.1} parent=1 // pred_check
      _
    $region3: #{pretrained_cnn_forward.1} parent=1 // pred_check_branch
      %12 = sbr.rel (0) target = $region5
    $region4: #{pretrained_cnn_forward.1} parent=1 // pred_region
      %s14 = ssub.s32 16, 16
      %15 = vsyncadd [#allocation3], %s14
      %s17 = sshll.u32 %s0, 4
      %s18 = int_to_ptr.vmem [resolvable:$true] %s17
      %20 = dma.vmem_to_smem %s18, 16, [#allocation2], [#allocation3]
    $region5: #{pretrained_cnn_forward.1} parent=1 // pred_fallthru
      _
    // Predicated region
    $region6: #{pretrained_cnn_forward.1} parent=1 // pred_check
      _
    $region7: #{pretrained_cnn_forward.1} parent=1 // pred_check_branch
      %22 = sbr.rel (0) target = $region9
    $region8: #{pretrained_cnn_forward.1} parent=1 // pred_region
      _
    $region9: #{pretrained_cnn_forward.1} parent=1 // pred_fallthru
      _
    // Predicated region
    $region10: #{pretrained_cnn_forward.1} parent=1 // pred_check
      _
    $region11: #{pretrained_cnn_forward.1} parent=1 // pred_check_branch
      %24 = sbr.rel (0) target = $region13
    $region12: #{pretrained_cnn_forward.1} parent=1 // pred_region
      _
    $region13: #{pretrained_cnn_forward.1} parent=1 // pred_fallthru
      _
    // Predicated region
    $region14: #{pretrained_cnn_forward.1} parent=1 // pred_check
      _
    $region15: #{pretrained_cnn_forward.1} parent=1 // pred_check_branch
      %26 = sbr.rel (0) target = $region17
    $region16: #{pretrained_cnn_forward.1} parent=1 // pred_region
      _
    $region17: #{pretrained_cnn_forward.1} parent=1 // pred_fallthru
      _
    // Predicated region
    $region18: #{pretrained_cnn_forward.1} parent=1 // pred_check
      _
    $region19: #{pretrained_cnn_forward.1} parent=1 // pred_check_branch
      %28 = sbr.rel (0) target = $region21
    $region20: #{pretrained_cnn_forward.1} parent=1 // pred_region
      _
    $region21: #{pretrained_cnn_forward.1} parent=1 // pred_fallthru
      _
    // Predicated region
    $region22: #{pretrained_cnn_forward.1} parent=1 // pred_check
      _
    $region23: #{pretrained_cnn_forward.1} parent=1 // pred_check_branch
      %30 = sbr.rel (0) target = $region25
    $region24: #{pretrained_cnn_forward.1} parent=1 // pred_region
      %31 = dma.done [#allocation3], 16
    $region25: #{pretrained_cnn_forward.1} parent=1 // pred_fallthru
      _
    %32 = sfence
    %v33 = vld [vmem:[%s1] sm:$0xf]
    %v34 = vld [vmem:[%s2] sm:$0xff]
    %v35 = vld [vmem:[%s2 + $0x8] sm:$0xff]
    %v36 = vld [vmem:[%s2 + $0x10] sm:$0xff]
    %v37 = vld [vmem:[%s2 + $0x18] sm:$0xff]
    %v38 = vld [vmem:[%s2 + $0x20] sm:$0xff]
    %v39 = vld [vmem:[%s2 + $0x28] sm:$0xff]
    %v40 = vld [vmem:[%s2 + $0x30] sm:$0xff]
    %v41 = vld [vmem:[%s2 + $0x38] sm:$0xff]
    %s42 = sld [smem:[#allocation2]]
    %s43 = sld [smem:[#allocation2 + $0x3]]
    %v44 = vstv %s42
    %v45 = vmul.f32 %v44, %v33
    %v46 = vstv %s43
    %v47 = vadd.f32 %v45, %v46
    %v48 = vmax.f32 %v47, 0.0
    %50 = vset.pattern.permute.xlu0 0
    %51 = vperm.xlu0 %50, %v34
    %v52 = vpop.permute.xlu0 %51
    %55 = vset.pattern.permute.xlu0 0
    %56 = vperm.xlu0 %55, %v35
    %v57 = vpop.permute.xlu0 %56
    %60 = vset.pattern.permute.xlu0 0
    %61 = vperm.xlu0 %60, %v36
    %v62 = vpop.permute.xlu0 %61
    %65 = vset.pattern.permute.xlu0 0
    %66 = vperm.xlu0 %65, %v37
    %v67 = vpop.permute.xlu0 %66
    %70 = vset.pattern.permute.xlu0 0
    %71 = vperm.xlu0 %70, %v38
    %v72 = vpop.permute.xlu0 %71
    %75 = vset.pattern.permute.xlu0 0
    %76 = vperm.xlu0 %75, %v39
    %v77 = vpop.permute.xlu0 %76
    %80 = vset.pattern.permute.xlu0 0
    %81 = vperm.xlu0 %80, %v40
    %v82 = vpop.permute.xlu0 %81
    %85 = vset.pattern.permute.xlu0 0
    %86 = vperm.xlu0 %85, %v41
    %v87 = vpop.permute.xlu0 %86
    %v90 = vlaneseq
    %v91 = vshrl.u32 %v90, 7
    %v92 = vsub.s32 0, %v91
    %v93 = vrot.slane %v48, %v92
    %v94 = vlaneseq
    %v95 = vshrl.u32 %v94, 7
    %v96 = vsub.s32 1, %v95
    %v97 = vrot.slane %v48, %v96
    %v98 = vlaneseq
    %v99 = vshrl.u32 %v98, 7
    %v100 = vsub.s32 2, %v99
    %v101 = vrot.slane %v48, %v100
    %v102 = vlaneseq
    %v103 = vshrl.u32 %v102, 7
    %v104 = vsub.s32 3, %v103
    %v105 = vrot.slane %v48, %v104
    %v110 = vmul.f32 %v52, %v93
    %v111 = vmul.f32 %v52, %v97
    %v112 = vmul.f32 %v52, %v101
    %v113 = vmul.f32 %v52, %v105
    %v114 = vmul.f32 %v57, %v93
    %v115 = vmul.f32 %v57, %v97
    %v116 = vmul.f32 %v57, %v101
    %v117 = vmul.f32 %v57, %v105
    %v118 = vmul.f32 %v62, %v93
    %v119 = vmul.f32 %v62, %v97
    %v120 = vmul.f32 %v62, %v101
    %v121 = vmul.f32 %v62, %v105
    %v122 = vmul.f32 %v67, %v93
    %v123 = vmul.f32 %v67, %v97
    %v124 = vmul.f32 %v67, %v101
    %v125 = vmul.f32 %v67, %v105
    %v126 = vmul.f32 %v72, %v93
    %v127 = vmul.f32 %v72, %v97
    %v128 = vmul.f32 %v72, %v101
    %v129 = vmul.f32 %v72, %v105
    %v130 = vmul.f32 %v77, %v93
    %v131 = vmul.f32 %v77, %v97
    %v132 = vmul.f32 %v77, %v101
    %v133 = vmul.f32 %v77, %v105
    %v134 = vmul.f32 %v82, %v93
    %v135 = vmul.f32 %v82, %v97
    %v136 = vmul.f32 %v82, %v101
    %v137 = vmul.f32 %v82, %v105
    %v138 = vmul.f32 %v87, %v93
    %v139 = vmul.f32 %v87, %v97
    %v140 = vmul.f32 %v87, %v101
    %v141 = vmul.f32 %v87, %v105
    %v142 = vadd.f32 %v110, 0.0
    %v143 = vadd.f32 %v111, 0.0
    %v144 = vadd.f32 %v112, 0.0
    %v145 = vadd.f32 %v113, 0.0
    %v146 = vadd.f32 %v114, 0.0
    %v147 = vadd.f32 %v115, 0.0
    %v148 = vadd.f32 %v116, 0.0
    %v149 = vadd.f32 %v117, 0.0
    %v150 = vadd.f32 %v118, 0.0
    %v151 = vadd.f32 %v119, 0.0
    %v152 = vadd.f32 %v120, 0.0
    %v153 = vadd.f32 %v121, 0.0
    %v154 = vadd.f32 %v122, 0.0
    %v155 = vadd.f32 %v123, 0.0
    %v156 = vadd.f32 %v124, 0.0
    %v157 = vadd.f32 %v125, 0.0
    %v158 = vadd.f32 %v126, 0.0
    %v159 = vadd.f32 %v127, 0.0
    %v160 = vadd.f32 %v128, 0.0
    %v161 = vadd.f32 %v129, 0.0
    %v162 = vadd.f32 %v130, 0.0
    %v163 = vadd.f32 %v131, 0.0
    %v164 = vadd.f32 %v132, 0.0
    %v165 = vadd.f32 %v133, 0.0
    %v166 = vadd.f32 %v134, 0.0
    %v167 = vadd.f32 %v135, 0.0
    %v168 = vadd.f32 %v136, 0.0
    %v169 = vadd.f32 %v137, 0.0
    %v170 = vadd.f32 %v138, 0.0
    %v171 = vadd.f32 %v139, 0.0
    %v172 = vadd.f32 %v140, 0.0
    %v173 = vadd.f32 %v141, 0.0
    %s174 = sld [smem:[#allocation2 + $0x1]]
    %s175 = sld [smem:[#allocation2 + $0x4]]
    %v176 = vstv %s174
    %v177 = vmul.f32 %v176, %v33
    %v178 = vstv %s175
    %v179 = vadd.f32 %v177, %v178
    %v180 = vmax.f32 %v179, 0.0
    %181 = vset.pattern.permute.xlu0 1
    %182 = vperm.xlu0 %181, %v34
    %v183 = vpop.permute.xlu0 %182
    %185 = vset.pattern.permute.xlu0 1
    %186 = vperm.xlu0 %185, %v35
    %v187 = vpop.permute.xlu0 %186
    %189 = vset.pattern.permute.xlu0 1
    %190 = vperm.xlu0 %189, %v36
    %v191 = vpop.permute.xlu0 %190
    %193 = vset.pattern.permute.xlu0 1
    %194 = vperm.xlu0 %193, %v37
    %v195 = vpop.permute.xlu0 %194
    %197 = vset.pattern.permute.xlu0 1
    %198 = vperm.xlu0 %197, %v38
    %v199 = vpop.permute.xlu0 %198
    %201 = vset.pattern.permute.xlu0 1
    %202 = vperm.xlu0 %201, %v39
    %v203 = vpop.permute.xlu0 %202
    %205 = vset.pattern.permute.xlu0 1
    %206 = vperm.xlu0 %205, %v40
    %v207 = vpop.permute.xlu0 %206
    %209 = vset.pattern.permute.xlu0 1
    %210 = vperm.xlu0 %209, %v41
    %v211 = vpop.permute.xlu0 %210
    %v214 = vlaneseq
    %v215 = vshrl.u32 %v214, 7
    %v216 = vsub.s32 0, %v215
    %v217 = vrot.slane %v180, %v216
    %v218 = vlaneseq
    %v219 = vshrl.u32 %v218, 7
    %v220 = vsub.s32 1, %v219
    %v221 = vrot.slane %v180, %v220
    %v222 = vlaneseq
    %v223 = vshrl.u32 %v222, 7
    %v224 = vsub.s32 2, %v223
    %v225 = vrot.slane %v180, %v224
    %v226 = vlaneseq
    %v227 = vshrl.u32 %v226, 7
    %v228 = vsub.s32 3, %v227
    %v229 = vrot.slane %v180, %v228
    %v234 = vmul.f32 %v183, %v217
    %v235 = vmul.f32 %v183, %v221
    %v236 = vmul.f32 %v183, %v225
    %v237 = vmul.f32 %v183, %v229
    %v238 = vmul.f32 %v187, %v217
    %v239 = vmul.f32 %v187, %v221
    %v240 = vmul.f32 %v187, %v225
    %v241 = vmul.f32 %v187, %v229
    %v242 = vmul.f32 %v191, %v217
    %v243 = vmul.f32 %v191, %v221
    %v244 = vmul.f32 %v191, %v225
    %v245 = vmul.f32 %v191, %v229
    %v246 = vmul.f32 %v195, %v217
    %v247 = vmul.f32 %v195, %v221
    %v248 = vmul.f32 %v195, %v225
    %v249 = vmul.f32 %v195, %v229
    %v250 = vmul.f32 %v199, %v217
    %v251 = vmul.f32 %v199, %v221
    %v252 = vmul.f32 %v199, %v225
    %v253 = vmul.f32 %v199, %v229
    %v254 = vmul.f32 %v203, %v217
    %v255 = vmul.f32 %v203, %v221
    %v256 = vmul.f32 %v203, %v225
    %v257 = vmul.f32 %v203, %v229
    %v258 = vmul.f32 %v207, %v217
    %v259 = vmul.f32 %v207, %v221
    %v260 = vmul.f32 %v207, %v225
    %v261 = vmul.f32 %v207, %v229
    %v262 = vmul.f32 %v211, %v217
    %v263 = vmul.f32 %v211, %v221
    %v264 = vmul.f32 %v211, %v225
    %v265 = vmul.f32 %v211, %v229
    %v266 = vadd.f32 %v142, %v234
    %v267 = vadd.f32 %v143, %v235
    %v268 = vadd.f32 %v144, %v236
    %v269 = vadd.f32 %v145, %v237
    %v270 = vadd.f32 %v146, %v238
    %v271 = vadd.f32 %v147, %v239
    %v272 = vadd.f32 %v148, %v240
    %v273 = vadd.f32 %v149, %v241
    %v274 = vadd.f32 %v150, %v242
    %v275 = vadd.f32 %v151, %v243
    %v276 = vadd.f32 %v152, %v244
    %v277 = vadd.f32 %v153, %v245
    %v278 = vadd.f32 %v154, %v246
    %v279 = vadd.f32 %v155, %v247
    %v280 = vadd.f32 %v156, %v248
    %v281 = vadd.f32 %v157, %v249
    %v282 = vadd.f32 %v158, %v250
    %v283 = vadd.f32 %v159, %v251
    %v284 = vadd.f32 %v160, %v252
    %v285 = vadd.f32 %v161, %v253
    %v286 = vadd.f32 %v162, %v254
    %v287 = vadd.f32 %v163, %v255
    %v288 = vadd.f32 %v164, %v256
    %v289 = vadd.f32 %v165, %v257
    %v290 = vadd.f32 %v166, %v258
    %v291 = vadd.f32 %v167, %v259
    %v292 = vadd.f32 %v168, %v260
    %v293 = vadd.f32 %v169, %v261
    %v294 = vadd.f32 %v170, %v262
    %v295 = vadd.f32 %v171, %v263
    %v296 = vadd.f32 %v172, %v264
    %v297 = vadd.f32 %v173, %v265
    %s298 = sld [smem:[#allocation2 + $0x2]]
    %s299 = sld [smem:[#allocation2 + $0x5]]
    %v300 = vstv %s298
    %v301 = vmul.f32 %v300, %v33
    %v302 = vstv %s299
    %v303 = vadd.f32 %v301, %v302
    %v304 = vmax.f32 %v303, 0.0
    %305 = vset.pattern.permute.xlu0 2
    %306 = vperm.xlu0 %305, %v34
    %v307 = vpop.permute.xlu0 %306
    %309 = vset.pattern.permute.xlu0 2
    %310 = vperm.xlu0 %309, %v35
    %v311 = vpop.permute.xlu0 %310
    %313 = vset.pattern.permute.xlu0 2
    %314 = vperm.xlu0 %313, %v36
    %v315 = vpop.permute.xlu0 %314
    %317 = vset.pattern.permute.xlu0 2
    %318 = vperm.xlu0 %317, %v37
    %v319 = vpop.permute.xlu0 %318
    %321 = vset.pattern.permute.xlu0 2
    %322 = vperm.xlu0 %321, %v38
    %v323 = vpop.permute.xlu0 %322
    %325 = vset.pattern.permute.xlu0 2
    %326 = vperm.xlu0 %325, %v39
    %v327 = vpop.permute.xlu0 %326
    %329 = vset.pattern.permute.xlu0 2
    %330 = vperm.xlu0 %329, %v40
    %v331 = vpop.permute.xlu0 %330
    %333 = vset.pattern.permute.xlu0 2
    %334 = vperm.xlu0 %333, %v41
    %v335 = vpop.permute.xlu0 %334
    %v338 = vlaneseq
    %v339 = vshrl.u32 %v338, 7
    %v340 = vsub.s32 0, %v339
    %v341 = vrot.slane %v304, %v340
    %v342 = vlaneseq
    %v343 = vshrl.u32 %v342, 7
    %v344 = vsub.s32 1, %v343
    %v345 = vrot.slane %v304, %v344
    %v346 = vlaneseq
    %v347 = vshrl.u32 %v346, 7
    %v348 = vsub.s32 2, %v347
    %v349 = vrot.slane %v304, %v348
    %v350 = vlaneseq
    %v351 = vshrl.u32 %v350, 7
    %v352 = vsub.s32 3, %v351
    %v353 = vrot.slane %v304, %v352
    %v358 = vmul.f32 %v307, %v341
    %v359 = vmul.f32 %v307, %v345
    %v360 = vmul.f32 %v307, %v349
    %v361 = vmul.f32 %v307, %v353
    %v362 = vmul.f32 %v311, %v341
    %v363 = vmul.f32 %v311, %v345
    %v364 = vmul.f32 %v311, %v349
    %v365 = vmul.f32 %v311, %v353
    %v366 = vmul.f32 %v315, %v341
    %v367 = vmul.f32 %v315, %v345
    %v368 = vmul.f32 %v315, %v349
    %v369 = vmul.f32 %v315, %v353
    %v370 = vmul.f32 %v319, %v341
    %v371 = vmul.f32 %v319, %v345
    %v372 = vmul.f32 %v319, %v349
    %v373 = vmul.f32 %v319, %v353
    %v374 = vmul.f32 %v323, %v341
    %v375 = vmul.f32 %v323, %v345
    %v376 = vmul.f32 %v323, %v349
    %v377 = vmul.f32 %v323, %v353
    %v378 = vmul.f32 %v327, %v341
    %v379 = vmul.f32 %v327, %v345
    %v380 = vmul.f32 %v327, %v349
    %v381 = vmul.f32 %v327, %v353
    %v382 = vmul.f32 %v331, %v341
    %v383 = vmul.f32 %v331, %v345
    %v384 = vmul.f32 %v331, %v349
    %v385 = vmul.f32 %v331, %v353
    %v386 = vmul.f32 %v335, %v341
    %v387 = vmul.f32 %v335, %v345
    %v388 = vmul.f32 %v335, %v349
    %v389 = vmul.f32 %v335, %v353
    %v390 = vadd.f32 %v266, %v358
    %v391 = vadd.f32 %v267, %v359
    %v392 = vadd.f32 %v268, %v360
    %v393 = vadd.f32 %v269, %v361
    %v394 = vadd.f32 %v270, %v362
    %v395 = vadd.f32 %v271, %v363
    %v396 = vadd.f32 %v272, %v364
    %v397 = vadd.f32 %v273, %v365
    %v398 = vadd.f32 %v274, %v366
    %v399 = vadd.f32 %v275, %v367
    %v400 = vadd.f32 %v276, %v368
    %v401 = vadd.f32 %v277, %v369
    %v402 = vadd.f32 %v278, %v370
    %v403 = vadd.f32 %v279, %v371
    %v404 = vadd.f32 %v280, %v372
    %v405 = vadd.f32 %v281, %v373
    %v406 = vadd.f32 %v282, %v374
    %v407 = vadd.f32 %v283, %v375
    %v408 = vadd.f32 %v284, %v376
    %v409 = vadd.f32 %v285, %v377
    %v410 = vadd.f32 %v286, %v378
    %v411 = vadd.f32 %v287, %v379
    %v412 = vadd.f32 %v288, %v380
    %v413 = vadd.f32 %v289, %v381
    %v414 = vadd.f32 %v290, %v382
    %v415 = vadd.f32 %v291, %v383
    %v416 = vadd.f32 %v292, %v384
    %v417 = vadd.f32 %v293, %v385
    %v418 = vadd.f32 %v294, %v386
    %v419 = vadd.f32 %v295, %v387
    %v420 = vadd.f32 %v296, %v388
    %v421 = vadd.f32 %v297, %v389
    %422 = vset.pattern.permute.xlu0 3
    %423 = vperm.xlu0 %422, %v34
    %v424 = vpop.permute.xlu0 %423
    %426 = vset.pattern.permute.xlu0 3
    %427 = vperm.xlu0 %426, %v35
    %v428 = vpop.permute.xlu0 %427
    %430 = vset.pattern.permute.xlu0 3
    %431 = vperm.xlu0 %430, %v36
    %v432 = vpop.permute.xlu0 %431
    %434 = vset.pattern.permute.xlu0 3
    %435 = vperm.xlu0 %434, %v37
    %v436 = vpop.permute.xlu0 %435
    %438 = vset.pattern.permute.xlu0 3
    %439 = vperm.xlu0 %438, %v38
    %v440 = vpop.permute.xlu0 %439
    %442 = vset.pattern.permute.xlu0 3
    %443 = vperm.xlu0 %442, %v39
    %v444 = vpop.permute.xlu0 %443
    %446 = vset.pattern.permute.xlu0 3
    %447 = vperm.xlu0 %446, %v40
    %v448 = vpop.permute.xlu0 %447
    %450 = vset.pattern.permute.xlu0 3
    %451 = vperm.xlu0 %450, %v41
    %v452 = vpop.permute.xlu0 %451
    %v454 = vadd.f32 %v390, %v424
    %v455 = vadd.f32 %v391, %v424
    %v456 = vadd.f32 %v392, %v424
    %v457 = vadd.f32 %v393, %v424
    %v458 = vadd.f32 %v394, %v428
    %v459 = vadd.f32 %v395, %v428
    %v460 = vadd.f32 %v396, %v428
    %v461 = vadd.f32 %v397, %v428
    %v462 = vadd.f32 %v398, %v432
    %v463 = vadd.f32 %v399, %v432
    %v464 = vadd.f32 %v400, %v432
    %v465 = vadd.f32 %v401, %v432
    %v466 = vadd.f32 %v402, %v436
    %v467 = vadd.f32 %v403, %v436
    %v468 = vadd.f32 %v404, %v436
    %v469 = vadd.f32 %v405, %v436
    %v470 = vadd.f32 %v406, %v440
    %v471 = vadd.f32 %v407, %v440
    %v472 = vadd.f32 %v408, %v440
    %v473 = vadd.f32 %v409, %v440
    %v474 = vadd.f32 %v410, %v444
    %v475 = vadd.f32 %v411, %v444
    %v476 = vadd.f32 %v412, %v444
    %v477 = vadd.f32 %v413, %v444
    %v478 = vadd.f32 %v414, %v448
    %v479 = vadd.f32 %v415, %v448
    %v480 = vadd.f32 %v416, %v448
    %v481 = vadd.f32 %v417, %v448
    %v482 = vadd.f32 %v418, %v452
    %v483 = vadd.f32 %v419, %v452
    %v484 = vadd.f32 %v420, %v452
    %v485 = vadd.f32 %v421, %v452
    %v486 = vmax.f32 %v454, 0.0
    %v487 = vmax.f32 %v455, 0.0
    %v488 = vmax.f32 %v456, 0.0
    %v489 = vmax.f32 %v457, 0.0
    %v490 = vmax.f32 %v458, 0.0
    %v491 = vmax.f32 %v459, 0.0
    %v492 = vmax.f32 %v460, 0.0
    %v493 = vmax.f32 %v461, 0.0
    %v494 = vmax.f32 %v462, 0.0
    %v495 = vmax.f32 %v463, 0.0
    %v496 = vmax.f32 %v464, 0.0
    %v497 = vmax.f32 %v465, 0.0
    %v498 = vmax.f32 %v466, 0.0
    %v499 = vmax.f32 %v467, 0.0
    %v500 = vmax.f32 %v468, 0.0
    %v501 = vmax.f32 %v469, 0.0
    %v502 = vmax.f32 %v470, 0.0
    %v503 = vmax.f32 %v471, 0.0
    %v504 = vmax.f32 %v472, 0.0
    %v505 = vmax.f32 %v473, 0.0
    %v506 = vmax.f32 %v474, 0.0
    %v507 = vmax.f32 %v475, 0.0
    %v508 = vmax.f32 %v476, 0.0
    %v509 = vmax.f32 %v477, 0.0
    %v510 = vmax.f32 %v478, 0.0
    %v511 = vmax.f32 %v479, 0.0
    %v512 = vmax.f32 %v480, 0.0
    %v513 = vmax.f32 %v481, 0.0
    %v514 = vmax.f32 %v482, 0.0
    %v515 = vmax.f32 %v483, 0.0
    %v516 = vmax.f32 %v484, 0.0
    %v517 = vmax.f32 %v485, 0.0
    %v518 = vlaneseq
    %v519 = vshrl.u32 %v518, 7
    %v520 = vadd.s32 %v519, 8
    %v521 = vadd.s32 %v519, 16
    %v522 = vadd.s32 %v519, 24
    %v523 = vadd.s32 %v519, 32
    %v524 = vadd.s32 %v519, 40
    %v525 = vadd.s32 %v519, 48
    %v526 = vadd.s32 %v519, 56
    %v527 = vadd.s32 %v519, 64
    %v528 = vadd.s32 %v519, 72
    %v529 = vadd.s32 %v519, 80
    %v530 = vadd.s32 %v519, 88
    %v531 = vadd.s32 %v519, 96
    %v532 = vadd.s32 %v519, 104
    %v533 = vadd.s32 %v519, 112
    %v534 = vadd.s32 %v519, 120
    %v535 = vadd.s32 %v519, 128
    %v536 = vadd.s32 %v519, 136
    %v537 = vadd.s32 %v519, 144
    %v538 = vadd.s32 %v519, 152
    %v539 = vadd.s32 %v519, 160
    %v540 = vadd.s32 %v519, 168
    %v541 = vadd.s32 %v519, 176
    %v542 = vadd.s32 %v519, 184
    %v543 = vadd.s32 %v519, 192
    %v544 = vadd.s32 %v519, 200
    %v545 = vadd.s32 %v519, 208
    %v546 = vadd.s32 %v519, 216
    %v547 = vadd.s32 %v519, 224
    %v548 = vadd.s32 %v519, 232
    %v549 = vadd.s32 %v519, 240
    %v550 = vadd.s32 %v519, 248
    %v551 = vadd.s32 %v519, 256
    %v552 = vadd.s32 %v519, 264
    %v553 = vadd.s32 %v519, 272
    %v554 = vadd.s32 %v519, 280
    %v555 = vadd.s32 %v519, 288
    %v556 = vadd.s32 %v519, 296
    %v557 = vadd.s32 %v519, 304
    %v558 = vadd.s32 %v519, 312
    %v559 = vadd.s32 %v519, 320
    %v560 = vadd.s32 %v519, 328
    %v561 = vadd.s32 %v519, 336
    %v562 = vadd.s32 %v519, 344
    %v563 = vadd.s32 %v519, 352
    %v564 = vadd.s32 %v519, 360
    %v565 = vadd.s32 %v519, 368
    %v566 = vadd.s32 %v519, 376
    %v567 = vadd.s32 %v519, 384
    %v568 = vadd.s32 %v519, 392
    %v569 = vadd.s32 %v519, 400
    %v570 = vadd.s32 %v519, 408
    %v571 = vadd.s32 %v519, 416
    %v572 = vadd.s32 %v519, 424
    %v573 = vadd.s32 %v519, 432
    %v574 = vadd.s32 %v519, 440
    %v575 = vadd.s32 %v519, 448
    %v576 = vadd.s32 %v519, 456
    %v577 = vadd.s32 %v519, 464
    %v578 = vadd.s32 %v519, 472
    %v579 = vadd.s32 %v519, 480
    %v580 = vadd.s32 %v519, 488
    %v581 = vadd.s32 %v519, 496
    %v582 = vadd.s32 %v519, 504
    %v583 = vlaneseq
    %v584 = vand.u32 %v583, 127
    %v585 = vmul.u32 %v584, 256
    %vm586 = vcmp.ge.s32.totalorder %v519, %v585
    %vm587 = vcmp.ge.s32.totalorder %v520, %v585
    %vm588 = vcmp.ge.s32.totalorder %v521, %v585
    %vm589 = vcmp.ge.s32.totalorder %v522, %v585
    %vm590 = vcmp.ge.s32.totalorder %v523, %v585
    %vm591 = vcmp.ge.s32.totalorder %v524, %v585
    %vm592 = vcmp.ge.s32.totalorder %v525, %v585
    %vm593 = vcmp.ge.s32.totalorder %v526, %v585
    %vm594 = vcmp.ge.s32.totalorder %v527, %v585
    %vm595 = vcmp.ge.s32.totalorder %v528, %v585
    %vm596 = vcmp.ge.s32.totalorder %v529, %v585
    %vm597 = vcmp.ge.s32.totalorder %v530, %v585
    %vm598 = vcmp.ge.s32.totalorder %v531, %v585
    %vm599 = vcmp.ge.s32.totalorder %v532, %v585
    %vm600 = vcmp.ge.s32.totalorder %v533, %v585
    %vm601 = vcmp.ge.s32.totalorder %v534, %v585
    %vm602 = vcmp.ge.s32.totalorder %v535, %v585
    %vm603 = vcmp.ge.s32.totalorder %v536, %v585
    %vm604 = vcmp.ge.s32.totalorder %v537, %v585
    %vm605 = vcmp.ge.s32.totalorder %v538, %v585
    %vm606 = vcmp.ge.s32.totalorder %v539, %v585
    %vm607 = vcmp.ge.s32.totalorder %v540, %v585
    %vm608 = vcmp.ge.s32.totalorder %v541, %v585
    %vm609 = vcmp.ge.s32.totalorder %v542, %v585
    %vm610 = vcmp.ge.s32.totalorder %v543, %v585
    %vm611 = vcmp.ge.s32.totalorder %v544, %v585
    %vm612 = vcmp.ge.s32.totalorder %v545, %v585
    %vm613 = vcmp.ge.s32.totalorder %v546, %v585
    %vm614 = vcmp.ge.s32.totalorder %v547, %v585
    %vm615 = vcmp.ge.s32.totalorder %v548, %v585
    %vm616 = vcmp.ge.s32.totalorder %v549, %v585
    %vm617 = vcmp.ge.s32.totalorder %v550, %v585
    %vm618 = vcmp.ge.s32.totalorder %v551, %v585
    %vm619 = vcmp.ge.s32.totalorder %v552, %v585
    %vm620 = vcmp.ge.s32.totalorder %v553, %v585
    %vm621 = vcmp.ge.s32.totalorder %v554, %v585
    %vm622 = vcmp.ge.s32.totalorder %v555, %v585
    %vm623 = vcmp.ge.s32.totalorder %v556, %v585
    %vm624 = vcmp.ge.s32.totalorder %v557, %v585
    %vm625 = vcmp.ge.s32.totalorder %v558, %v585
    %vm626 = vcmp.ge.s32.totalorder %v559, %v585
    %vm627 = vcmp.ge.s32.totalorder %v560, %v585
    %vm628 = vcmp.ge.s32.totalorder %v561, %v585
    %vm629 = vcmp.ge.s32.totalorder %v562, %v585
    %vm630 = vcmp.ge.s32.totalorder %v563, %v585
    %vm631 = vcmp.ge.s32.totalorder %v564, %v585
    %vm632 = vcmp.ge.s32.totalorder %v565, %v585
    %vm633 = vcmp.ge.s32.totalorder %v566, %v585
    %vm634 = vcmp.ge.s32.totalorder %v567, %v585
    %vm635 = vcmp.ge.s32.totalorder %v568, %v585
    %vm636 = vcmp.ge.s32.totalorder %v569, %v585
    %vm637 = vcmp.ge.s32.totalorder %v570, %v585
    %vm638 = vcmp.ge.s32.totalorder %v571, %v585
    %vm639 = vcmp.ge.s32.totalorder %v572, %v585
    %vm640 = vcmp.ge.s32.totalorder %v573, %v585
    %vm641 = vcmp.ge.s32.totalorder %v574, %v585
    %vm642 = vcmp.ge.s32.totalorder %v575, %v585
    %vm643 = vcmp.ge.s32.totalorder %v576, %v585
    %vm644 = vcmp.ge.s32.totalorder %v577, %v585
    %vm645 = vcmp.ge.s32.totalorder %v578, %v585
    %vm646 = vcmp.ge.s32.totalorder %v579, %v585
    %vm647 = vcmp.ge.s32.totalorder %v580, %v585
    %vm648 = vcmp.ge.s32.totalorder %v581, %v585
    %vm649 = vcmp.ge.s32.totalorder %v582, %v585
    %v650 = vadd.s32 %v584, 1
    %v651 = vmul.u32 %v650, 256
    %vm652 = vcmp.lt.s32.totalorder %v519, %v651
    %vm653 = vcmp.lt.s32.totalorder %v520, %v651
    %vm654 = vcmp.lt.s32.totalorder %v521, %v651
    %vm655 = vcmp.lt.s32.totalorder %v522, %v651
    %vm656 = vcmp.lt.s32.totalorder %v523, %v651
    %vm657 = vcmp.lt.s32.totalorder %v524, %v651
    %vm658 = vcmp.lt.s32.totalorder %v525, %v651
    %vm659 = vcmp.lt.s32.totalorder %v526, %v651
    %vm660 = vcmp.lt.s32.totalorder %v527, %v651
    %vm661 = vcmp.lt.s32.totalorder %v528, %v651
    %vm662 = vcmp.lt.s32.totalorder %v529, %v651
    %vm663 = vcmp.lt.s32.totalorder %v530, %v651
    %vm664 = vcmp.lt.s32.totalorder %v531, %v651
    %vm665 = vcmp.lt.s32.totalorder %v532, %v651
    %vm666 = vcmp.lt.s32.totalorder %v533, %v651
    %vm667 = vcmp.lt.s32.totalorder %v534, %v651
    %vm668 = vcmp.lt.s32.totalorder %v535, %v651
    %vm669 = vcmp.lt.s32.totalorder %v536, %v651
    %vm670 = vcmp.lt.s32.totalorder %v537, %v651
    %vm671 = vcmp.lt.s32.totalorder %v538, %v651
    %vm672 = vcmp.lt.s32.totalorder %v539, %v651
    %vm673 = vcmp.lt.s32.totalorder %v540, %v651
    %vm674 = vcmp.lt.s32.totalorder %v541, %v651
    %vm675 = vcmp.lt.s32.totalorder %v542, %v651
    %vm676 = vcmp.lt.s32.totalorder %v543, %v651
    %vm677 = vcmp.lt.s32.totalorder %v544, %v651
    %vm678 = vcmp.lt.s32.totalorder %v545, %v651
    %vm679 = vcmp.lt.s32.totalorder %v546, %v651
    %vm680 = vcmp.lt.s32.totalorder %v547, %v651
    %vm681 = vcmp.lt.s32.totalorder %v548, %v651
    %vm682 = vcmp.lt.s32.totalorder %v549, %v651
    %vm683 = vcmp.lt.s32.totalorder %v550, %v651
    %vm684 = vcmp.lt.s32.totalorder %v551, %v651
    %vm685 = vcmp.lt.s32.totalorder %v552, %v651
    %vm686 = vcmp.lt.s32.totalorder %v553, %v651
    %vm687 = vcmp.lt.s32.totalorder %v554, %v651
    %vm688 = vcmp.lt.s32.totalorder %v555, %v651
    %vm689 = vcmp.lt.s32.totalorder %v556, %v651
    %vm690 = vcmp.lt.s32.totalorder %v557, %v651
    %vm691 = vcmp.lt.s32.totalorder %v558, %v651
    %vm692 = vcmp.lt.s32.totalorder %v559, %v651
    %vm693 = vcmp.lt.s32.totalorder %v560, %v651
    %vm694 = vcmp.lt.s32.totalorder %v561, %v651
    %vm695 = vcmp.lt.s32.totalorder %v562, %v651
    %vm696 = vcmp.lt.s32.totalorder %v563, %v651
    %vm697 = vcmp.lt.s32.totalorder %v564, %v651
    %vm698 = vcmp.lt.s32.totalorder %v565, %v651
    %vm699 = vcmp.lt.s32.totalorder %v566, %v651
    %vm700 = vcmp.lt.s32.totalorder %v567, %v651
    %vm701 = vcmp.lt.s32.totalorder %v568, %v651
    %vm702 = vcmp.lt.s32.totalorder %v569, %v651
    %vm703 = vcmp.lt.s32.totalorder %v570, %v651
    %vm704 = vcmp.lt.s32.totalorder %v571, %v651
    %vm705 = vcmp.lt.s32.totalorder %v572, %v651
    %vm706 = vcmp.lt.s32.totalorder %v573, %v651
    %vm707 = vcmp.lt.s32.totalorder %v574, %v651
    %vm708 = vcmp.lt.s32.totalorder %v575, %v651
    %vm709 = vcmp.lt.s32.totalorder %v576, %v651
    %vm710 = vcmp.lt.s32.totalorder %v577, %v651
    %vm711 = vcmp.lt.s32.totalorder %v578, %v651
    %vm712 = vcmp.lt.s32.totalorder %v579, %v651
    %vm713 = vcmp.lt.s32.totalorder %v580, %v651
    %vm714 = vcmp.lt.s32.totalorder %v581, %v651
    %vm715 = vcmp.lt.s32.totalorder %v582, %v651
    %vm716 = vmand %vm586, %vm652
    %vm717 = vmand %vm587, %vm653
    %vm718 = vmand %vm588, %vm654
    %vm719 = vmand %vm589, %vm655
    %vm720 = vmand %vm590, %vm656
    %vm721 = vmand %vm591, %vm657
    %vm722 = vmand %vm592, %vm658
    %vm723 = vmand %vm593, %vm659
    %vm724 = vmand %vm594, %vm660
    %vm725 = vmand %vm595, %vm661
    %vm726 = vmand %vm596, %vm662
    %vm727 = vmand %vm597, %vm663
    %vm728 = vmand %vm598, %vm664
    %vm729 = vmand %vm599, %vm665
    %vm730 = vmand %vm600, %vm666
    %vm731 = vmand %vm601, %vm667
    %vm732 = vmand %vm602, %vm668
    %vm733 = vmand %vm603, %vm669
    %vm734 = vmand %vm604, %vm670
    %vm735 = vmand %vm605, %vm671
    %vm736 = vmand %vm606, %vm672
    %vm737 = vmand %vm607, %vm673
    %vm738 = vmand %vm608, %vm674
    %vm739 = vmand %vm609, %vm675
    %vm740 = vmand %vm610, %vm676
    %vm741 = vmand %vm611, %vm677
    %vm742 = vmand %vm612, %vm678
    %vm743 = vmand %vm613, %vm679
    %vm744 = vmand %vm614, %vm680
    %vm745 = vmand %vm615, %vm681
    %vm746 = vmand %vm616, %vm682
    %vm747 = vmand %vm617, %vm683
    %vm748 = vmand %vm618, %vm684
    %vm749 = vmand %vm619, %vm685
    %vm750 = vmand %vm620, %vm686
    %vm751 = vmand %vm621, %vm687
    %vm752 = vmand %vm622, %vm688
    %vm753 = vmand %vm623, %vm689
    %vm754 = vmand %vm624, %vm690
    %vm755 = vmand %vm625, %vm691
    %vm756 = vmand %vm626, %vm692
    %vm757 = vmand %vm627, %vm693
    %vm758 = vmand %vm628, %vm694
    %vm759 = vmand %vm629, %vm695
    %vm760 = vmand %vm630, %vm696
    %vm761 = vmand %vm631, %vm697
    %vm762 = vmand %vm632, %vm698
    %vm763 = vmand %vm633, %vm699
    %vm764 = vmand %vm634, %vm700
    %vm765 = vmand %vm635, %vm701
    %vm766 = vmand %vm636, %vm702
    %vm767 = vmand %vm637, %vm703
    %vm768 = vmand %vm638, %vm704
    %vm769 = vmand %vm639, %vm705
    %vm770 = vmand %vm640, %vm706
    %vm771 = vmand %vm641, %vm707
    %vm772 = vmand %vm642, %vm708
    %vm773 = vmand %vm643, %vm709
    %vm774 = vmand %vm644, %vm710
    %vm775 = vmand %vm645, %vm711
    %vm776 = vmand %vm646, %vm712
    %vm777 = vmand %vm647, %vm713
    %vm778 = vmand %vm648, %vm714
    %vm779 = vmand %vm649, %vm715
    %v780 = vsel %vm716, 0.00390625, 0.0
    %v781 = vsel %vm717, 0.00390625, 0.0
    %v782 = vsel %vm718, 0.00390625, 0.0
    %v783 = vsel %vm719, 0.00390625, 0.0
    %v784 = vsel %vm720, 0.00390625, 0.0
    %v785 = vsel %vm721, 0.00390625, 0.0
    %v786 = vsel %vm722, 0.00390625, 0.0
    %v787 = vsel %vm723, 0.00390625, 0.0
    %v788 = vsel %vm724, 0.00390625, 0.0
    %v789 = vsel %vm725, 0.00390625, 0.0
    %v790 = vsel %vm726, 0.00390625, 0.0
    %v791 = vsel %vm727, 0.00390625, 0.0
    %v792 = vsel %vm728, 0.00390625, 0.0
    %v793 = vsel %vm729, 0.00390625, 0.0
    %v794 = vsel %vm730, 0.00390625, 0.0
    %v795 = vsel %vm731, 0.00390625, 0.0
    %v796 = vsel %vm732, 0.00390625, 0.0
    %v797 = vsel %vm733, 0.00390625, 0.0
    %v798 = vsel %vm734, 0.00390625, 0.0
    %v799 = vsel %vm735, 0.00390625, 0.0
    %v800 = vsel %vm736, 0.00390625, 0.0
    %v801 = vsel %vm737, 0.00390625, 0.0
    %v802 = vsel %vm738, 0.00390625, 0.0
    %v803 = vsel %vm739, 0.00390625, 0.0
    %v804 = vsel %vm740, 0.00390625, 0.0
    %v805 = vsel %vm741, 0.00390625, 0.0
    %v806 = vsel %vm742, 0.00390625, 0.0
    %v807 = vsel %vm743, 0.00390625, 0.0
    %v808 = vsel %vm744, 0.00390625, 0.0
    %v809 = vsel %vm745, 0.00390625, 0.0
    %v810 = vsel %vm746, 0.00390625, 0.0
    %v811 = vsel %vm747, 0.00390625, 0.0
    %v812 = vsel %vm748, 0.00390625, 0.0
    %v813 = vsel %vm749, 0.00390625, 0.0
    %v814 = vsel %vm750, 0.00390625, 0.0
    %v815 = vsel %vm751, 0.00390625, 0.0
    %v816 = vsel %vm752, 0.00390625, 0.0
    %v817 = vsel %vm753, 0.00390625, 0.0
    %v818 = vsel %vm754, 0.00390625, 0.0
    %v819 = vsel %vm755, 0.00390625, 0.0
    %v820 = vsel %vm756, 0.00390625, 0.0
    %v821 = vsel %vm757, 0.00390625, 0.0
    %v822 = vsel %vm758, 0.00390625, 0.0
    %v823 = vsel %vm759, 0.00390625, 0.0
    %v824 = vsel %vm760, 0.00390625, 0.0
    %v825 = vsel %vm761, 0.00390625, 0.0
    %v826 = vsel %vm762, 0.00390625, 0.0
    %v827 = vsel %vm763, 0.00390625, 0.0
    %v828 = vsel %vm764, 0.00390625, 0.0
    %v829 = vsel %vm765, 0.00390625, 0.0
    %v830 = vsel %vm766, 0.00390625, 0.0
    %v831 = vsel %vm767, 0.00390625, 0.0
    %v832 = vsel %vm768, 0.00390625, 0.0
    %v833 = vsel %vm769, 0.00390625, 0.0
    %v834 = vsel %vm770, 0.00390625, 0.0
    %v835 = vsel %vm771, 0.00390625, 0.0
    %v836 = vsel %vm772, 0.00390625, 0.0
    %v837 = vsel %vm773, 0.00390625, 0.0
    %v838 = vsel %vm774, 0.00390625, 0.0
    %v839 = vsel %vm775, 0.00390625, 0.0
    %v840 = vsel %vm776, 0.00390625, 0.0
    %v841 = vsel %vm777, 0.00390625, 0.0
    %v842 = vsel %vm778, 0.00390625, 0.0
    %v843 = vsel %vm779, 0.00390625, 0.0
    %844 = vmatprep.subr.mxu0 0.0
    %845 = vmatpush1.msra.mxu0 %v780
    %846 = vmatprep.subr.mxu0 0.0
    %847 = vmatpush1.msra.mxu0 %v781
    %848 = vmatprep.subr.mxu0 0.0
    %849 = vmatpush1.msra.mxu0 %v782
    %850 = vmatprep.subr.mxu0 0.0
    %851 = vmatpush1.msra.mxu0 %v783
    %852 = vmatprep.subr.mxu0 0.0
    %853 = vmatpush1.msra.mxu0 %v784
    %854 = vmatprep.subr.mxu0 0.0
    %855 = vmatpush1.msra.mxu0 %v785
    %856 = vmatprep.subr.mxu0 0.0
    %857 = vmatpush1.msra.mxu0 %v786
    %858 = vmatprep.subr.mxu0 0.0
    %859 = vmatpush1.msra.mxu0 %v787
    %860 = vmatprep.subr.mxu0 0.0
    %861 = vmatpush1.msra.mxu0 %v788
    %862 = vmatprep.subr.mxu0 0.0
    %863 = vmatpush1.msra.mxu0 %v789
    %864 = vmatprep.subr.mxu0 0.0
    %865 = vmatpush1.msra.mxu0 %v790
    %866 = vmatprep.subr.mxu0 0.0
    %867 = vmatpush1.msra.mxu0 %v791
    %868 = vmatprep.subr.mxu0 0.0
    %869 = vmatpush1.msra.mxu0 %v792
    %870 = vmatprep.subr.mxu0 0.0
    %871 = vmatpush1.msra.mxu0 %v793
    %872 = vmatprep.subr.mxu0 0.0
    %873 = vmatpush1.msra.mxu0 %v794
    %874 = vmatprep.subr.mxu0 0.0
    %875 = vmatpush1.msra.mxu0 %v795
    %876 = vmatprep.subr.mxu0 0.0
    %877 = vmatpush1.msra.mxu0 %v796
    %878 = vmatprep.subr.mxu0 0.0
    %879 = vmatpush1.msra.mxu0 %v797
    %880 = vmatprep.subr.mxu0 0.0
    %881 = vmatpush1.msra.mxu0 %v798
    %882 = vmatprep.subr.mxu0 0.0
    %883 = vmatpush1.msra.mxu0 %v799
    %884 = vmatprep.subr.mxu0 0.0
    %885 = vmatpush1.msra.mxu0 %v800
    %886 = vmatprep.subr.mxu0 0.0
    %887 = vmatpush1.msra.mxu0 %v801
    %888 = vmatprep.subr.mxu0 0.0
    %889 = vmatpush1.msra.mxu0 %v802
    %890 = vmatprep.subr.mxu0 0.0
    %891 = vmatpush1.msra.mxu0 %v803
    %892 = vmatprep.subr.mxu0 0.0
    %893 = vmatpush1.msra.mxu0 %v804
    %894 = vmatprep.subr.mxu0 0.0
    %895 = vmatpush1.msra.mxu0 %v805
    %896 = vmatprep.subr.mxu0 0.0
    %897 = vmatpush1.msra.mxu0 %v806
    %898 = vmatprep.subr.mxu0 0.0
    %899 = vmatpush1.msra.mxu0 %v807
    %900 = vmatprep.subr.mxu0 0.0
    %901 = vmatpush1.msra.mxu0 %v808
    %902 = vmatprep.subr.mxu0 0.0
    %903 = vmatpush1.msra.mxu0 %v809
    %904 = vmatprep.subr.mxu0 0.0
    %905 = vmatpush1.msra.mxu0 %v810
    %906 = vmatprep.subr.mxu0 0.0
    %907 = vmatpush1.msra.mxu0 %v811
    %908 = vmatprep.mubr.f32.mxu0 %v487
    %909 = vmatmul.mubr.f32.gmra.mrb[0].mxu0 %v486
    %v910 = vpop.f32.mrb[0].mxu0
    %v911 = vadd.f32 0.0, %v910
    %v912 = vpop.f32.mrb[0].mxu0
    %913 = vmatprep.mubr.f32.mxu0 %v491
    %914 = vmatmul.mubr.f32.gmra.mrb[0].mxu0 %v490
    %v915 = vpop.f32.mrb[0].mxu0
    %v916 = vadd.f32 0.0, %v915
    %v917 = vpop.f32.mrb[0].mxu0
    %918 = vmatprep.mubr.f32.mxu0 %v495
    %919 = vmatmul.mubr.f32.gmra.mrb[0].mxu0 %v494
    %v920 = vpop.f32.mrb[0].mxu0
    %v921 = vadd.f32 0.0, %v920
    %v922 = vpop.f32.mrb[0].mxu0
    %923 = vmatprep.mubr.f32.mxu0 %v499
    %924 = vmatmul.mubr.f32.gmra.mrb[0].mxu0 %v498
    %v925 = vpop.f32.mrb[0].mxu0
    %v926 = vadd.f32 0.0, %v925
    %v927 = vpop.f32.mrb[0].mxu0
    %928 = vmatprep.mubr.f32.mxu0 %v503
    %929 = vmatmul.mubr.f32.gmra.mrb[0].mxu0 %v502
    %v930 = vpop.f32.mrb[0].mxu0
    %v931 = vadd.f32 0.0, %v930
    %v932 = vpop.f32.mrb[0].mxu0
    %933 = vmatprep.mubr.f32.mxu0 %v507
    %934 = vmatmul.mubr.f32.gmra.mrb[0].mxu0 %v506
    %v935 = vpop.f32.mrb[0].mxu0
    %v936 = vadd.f32 0.0, %v935
    %v937 = vpop.f32.mrb[0].mxu0
    %938 = vmatprep.mubr.f32.mxu0 %v511
    %939 = vmatmul.mubr.f32.gmra.mrb[0].mxu0 %v510
    %v940 = vpop.f32.mrb[0].mxu0
    %v941 = vadd.f32 0.0, %v940
    %v942 = vpop.f32.mrb[0].mxu0
    %943 = vmatprep.mubr.f32.mxu0 %v515
    %944 = vmatmul.mubr.f32.gmra.mrb[0].mxu0 %v514
    %v945 = vpop.f32.mrb[0].mxu0
    %v946 = vadd.f32 0.0, %v945
    %v947 = vpop.f32.mrb[0].mxu0
    %948 = vdwg.mxu0
    %949 = vmatprep.subr.mxu0 0.0
    %950 = vmatpush1.msra.mxu0 %v812
    %951 = vmatprep.subr.mxu0 0.0
    %952 = vmatpush1.msra.mxu0 %v813
    %953 = vmatprep.subr.mxu0 0.0
    %954 = vmatpush1.msra.mxu0 %v814
    %955 = vmatprep.subr.mxu0 0.0
    %956 = vmatpush1.msra.mxu0 %v815
    %957 = vmatprep.subr.mxu0 0.0
    %958 = vmatpush1.msra.mxu0 %v816
    %959 = vmatprep.subr.mxu0 0.0
    %960 = vmatpush1.msra.mxu0 %v817
    %961 = vmatprep.subr.mxu0 0.0
    %962 = vmatpush1.msra.mxu0 %v818
    %963 = vmatprep.subr.mxu0 0.0
    %964 = vmatpush1.msra.mxu0 %v819
    %965 = vmatprep.subr.mxu0 0.0
    %966 = vmatpush1.msra.mxu0 %v820
    %967 = vmatprep.subr.mxu0 0.0
    %968 = vmatpush1.msra.mxu0 %v821
    %969 = vmatprep.subr.mxu0 0.0
    %970 = vmatpush1.msra.mxu0 %v822
    %971 = vmatprep.subr.mxu0 0.0
    %972 = vmatpush1.msra.mxu0 %v823
    %973 = vmatprep.subr.mxu0 0.0
    %974 = vmatpush1.msra.mxu0 %v824
    %975 = vmatprep.subr.mxu0 0.0
    %976 = vmatpush1.msra.mxu0 %v825
    %977 = vmatprep.subr.mxu0 0.0
    %978 = vmatpush1.msra.mxu0 %v826
    %979 = vmatprep.subr.mxu0 0.0
    %980 = vmatpush1.msra.mxu0 %v827
    %981 = vmatprep.subr.mxu0 0.0
    %982 = vmatpush1.msra.mxu0 %v828
    %983 = vmatprep.subr.mxu0 0.0
    %984 = vmatpush1.msra.mxu0 %v829
    %985 = vmatprep.subr.mxu0 0.0
    %986 = vmatpush1.msra.mxu0 %v830
    %987 = vmatprep.subr.mxu0 0.0
    %988 = vmatpush1.msra.mxu0 %v831
    %989 = vmatprep.subr.mxu0 0.0
    %990 = vmatpush1.msra.mxu0 %v832
    %991 = vmatprep.subr.mxu0 0.0
    %992 = vmatpush1.msra.mxu0 %v833
    %993 = vmatprep.subr.mxu0 0.0
    %994 = vmatpush1.msra.mxu0 %v834
    %995 = vmatprep.subr.mxu0 0.0
    %996 = vmatpush1.msra.mxu0 %v835
    %997 = vmatprep.subr.mxu0 0.0
    %998 = vmatpush1.msra.mxu0 %v836
    %999 = vmatprep.subr.mxu0 0.0
    %1000 = vmatpush1.msra.mxu0 %v837
    %1001 = vmatprep.subr.mxu0 0.0
    %1002 = vmatpush1.msra.mxu0 %v838
    %1003 = vmatprep.subr.mxu0 0.0
    %1004 = vmatpush1.msra.mxu0 %v839
    %1005 = vmatprep.subr.mxu0 0.0
    %1006 = vmatpush1.msra.mxu0 %v840
    %1007 = vmatprep.subr.mxu0 0.0
    %1008 = vmatpush1.msra.mxu0 %v841
    %1009 = vmatprep.subr.mxu0 0.0
    %1010 = vmatpush1.msra.mxu0 %v842
    %1011 = vmatprep.subr.mxu0 0.0
    %1012 = vmatpush1.msra.mxu0 %v843
    %1013 = vmatprep.mubr.f32.mxu0 %v489
    %1014 = vmatmul.mubr.f32.gmra.mrb[0].mxu0 %v488
    %v1015 = vpop.f32.mrb[0].mxu0
    %v1016 = vadd.f32 %v911, %v1015
    %v1017 = vpop.f32.mrb[0].mxu0
    %1018 = vmatprep.mubr.f32.mxu0 %v493
    %1019 = vmatmul.mubr.f32.gmra.mrb[0].mxu0 %v492
    %v1020 = vpop.f32.mrb[0].mxu0
    %v1021 = vadd.f32 %v916, %v1020
    %v1022 = vpop.f32.mrb[0].mxu0
    %1023 = vmatprep.mubr.f32.mxu0 %v497
    %1024 = vmatmul.mubr.f32.gmra.mrb[0].mxu0 %v496
    %v1025 = vpop.f32.mrb[0].mxu0
    %v1026 = vadd.f32 %v921, %v1025
    %v1027 = vpop.f32.mrb[0].mxu0
    %1028 = vmatprep.mubr.f32.mxu0 %v501
    %1029 = vmatmul.mubr.f32.gmra.mrb[0].mxu0 %v500
    %v1030 = vpop.f32.mrb[0].mxu0
    %v1031 = vadd.f32 %v926, %v1030
    %v1032 = vpop.f32.mrb[0].mxu0
    %1033 = vmatprep.mubr.f32.mxu0 %v505
    %1034 = vmatmul.mubr.f32.gmra.mrb[0].mxu0 %v504
    %v1035 = vpop.f32.mrb[0].mxu0
    %v1036 = vadd.f32 %v931, %v1035
    %v1037 = vpop.f32.mrb[0].mxu0
    %1038 = vmatprep.mubr.f32.mxu0 %v509
    %1039 = vmatmul.mubr.f32.gmra.mrb[0].mxu0 %v508
    %v1040 = vpop.f32.mrb[0].mxu0
    %v1041 = vadd.f32 %v936, %v1040
    %v1042 = vpop.f32.mrb[0].mxu0
    %1043 = vmatprep.mubr.f32.mxu0 %v513
    %1044 = vmatmul.mubr.f32.gmra.mrb[0].mxu0 %v512
    %v1045 = vpop.f32.mrb[0].mxu0
    %v1046 = vadd.f32 %v941, %v1045
    %v1047 = vpop.f32.mrb[0].mxu0
    %1048 = vmatprep.mubr.f32.mxu0 %v517
    %1049 = vmatmul.mubr.f32.gmra.mrb[0].mxu0 %v516
    %v1050 = vpop.f32.mrb[0].mxu0
    %v1051 = vadd.f32 %v946, %v1050
    %v1052 = vpop.f32.mrb[0].mxu0
    %1053 = vdwg.mxu0
    %v1054 = vld [vmem:[%s3] sm:$0xff]
    %v1055 = vld [vmem:[%s3 + $0x8] sm:$0xff]
    %v1056 = vld [vmem:[%s3 + $0x10] sm:$0xff]
    %v1057 = vld [vmem:[%s3 + $0x18] sm:$0xff]
    %1058 = vset.pattern.permute.xlu0 4
    %1059 = vperm.xlu0 %1058, %v34
    %v1060 = vpop.permute.xlu0 %1059
    %1062 = vset.pattern.permute.xlu0 4
    %1063 = vperm.xlu0 %1062, %v35
    %v1064 = vpop.permute.xlu0 %1063
    %1066 = vset.pattern.permute.xlu0 4
    %1067 = vperm.xlu0 %1066, %v36
    %v1068 = vpop.permute.xlu0 %1067
    %1070 = vset.pattern.permute.xlu0 4
    %1071 = vperm.xlu0 %1070, %v37
    %v1072 = vpop.permute.xlu0 %1071
    %vm1074 = vcmask 523264
    %v1076 = vsel %vm1074, %v1054, 0
    %v1079 = vsel %vm1074, %v1055, 0
    %v1082 = vsel %vm1074, %v1056, 0
    %v1085 = vsel %vm1074, %v1057, 0
    %1087 = vmatprep.subr.mxu0 0.0
    %1088 = vmatpush1.msra.mxu0 %v1016
    %1089 = vmatprep.subr.mxu0 0.0
    %1090 = vmatpush1.msra.mxu0 %v1021
    %1091 = vmatprep.subr.mxu0 0.0
    %1092 = vmatpush1.msra.mxu0 %v1026
    %1093 = vmatprep.subr.mxu0 0.0
    %1094 = vmatpush1.msra.mxu0 %v1031
    %1095 = vmatprep.subr.mxu0 0.0
    %1096 = vmatpush1.msra.mxu0 %v1036
    %1097 = vmatprep.subr.mxu0 0.0
    %1098 = vmatpush1.msra.mxu0 %v1041
    %1099 = vmatprep.subr.mxu0 0.0
    %1100 = vmatpush1.msra.mxu0 %v1046
    %1101 = vmatprep.subr.mxu0 0.0
    %1102 = vmatpush1.msra.mxu0 %v1051
    %1103 = vmatprep.subr.mxu0 0.0
    %1104 = vmatpush1.msra.mxu0 0.0
    %1105 = vmatprep.subr.mxu0 0.0
    %1106 = vmatpush1.msra.mxu0 0.0
    %1107 = vmatprep.subr.mxu0 0.0
    %1108 = vmatpush1.msra.mxu0 0.0
    %1109 = vmatprep.subr.mxu0 0.0
    %1110 = vmatpush1.msra.mxu0 0.0
    %1111 = vmatprep.subr.mxu0 0.0
    %1112 = vmatpush1.msra.mxu0 0.0
    %1113 = vmatprep.subr.mxu0 0.0
    %1114 = vmatpush1.msra.mxu0 0.0
    %1115 = vmatprep.subr.mxu0 0.0
    %1116 = vmatpush1.msra.mxu0 0.0
    %1117 = vmatprep.subr.mxu0 0.0
    %1118 = vmatpush1.msra.mxu0 0.0
    %1119 = vmatprep.subr.mxu0 0.0
    %1120 = vmatpush1.msra.mxu0 0.0
    %1121 = vmatprep.subr.mxu0 0.0
    %1122 = vmatpush1.msra.mxu0 0.0
    %1123 = vmatprep.subr.mxu0 0.0
    %1124 = vmatpush1.msra.mxu0 0.0
    %1125 = vmatprep.subr.mxu0 0.0
    %1126 = vmatpush1.msra.mxu0 0.0
    %1127 = vmatprep.subr.mxu0 0.0
    %1128 = vmatpush1.msra.mxu0 0.0
    %1129 = vmatprep.subr.mxu0 0.0
    %1130 = vmatpush1.msra.mxu0 0.0
    %1131 = vmatprep.subr.mxu0 0.0
    %1132 = vmatpush1.msra.mxu0 0.0
    %1133 = vmatprep.subr.mxu0 0.0
    %1134 = vmatpush1.msra.mxu0 0.0
    %1135 = vmatprep.subr.mxu0 0.0
    %1136 = vmatpush1.msra.mxu0 0.0
    %1137 = vmatprep.subr.mxu0 0.0
    %1138 = vmatpush1.msra.mxu0 0.0
    %1139 = vmatprep.subr.mxu0 0.0
    %1140 = vmatpush1.msra.mxu0 0.0
    %1141 = vmatprep.subr.mxu0 0.0
    %1142 = vmatpush1.msra.mxu0 0.0
    %1143 = vmatprep.subr.mxu0 0.0
    %1144 = vmatpush1.msra.mxu0 0.0
    %1145 = vmatprep.subr.mxu0 0.0
    %1146 = vmatpush1.msra.mxu0 0.0
    %1147 = vmatprep.subr.mxu0 0.0
    %1148 = vmatpush1.msra.mxu0 0.0
    %1149 = vmatprep.subr.mxu0 0.0
    %1150 = vmatpush1.msra.mxu0 0.0
    %1151 = vmatprep.mubr.f32.mxu0 0.0
    %1152 = vmatmul.mubr.f32.gmra.mrb[0].mxu0 %v1076
    %v1153 = vpop.f32.mrb[0].mxu0
    %v1154 = vadd.f32 %v1060, %v1153
    %v1155 = vpop.f32.mrb[0].mxu0
    %1156 = vmatprep.mubr.f32.mxu0 0.0
    %1157 = vmatmul.mubr.f32.gmra.mrb[0].mxu0 %v1079
    %v1158 = vpop.f32.mrb[0].mxu0
    %v1159 = vadd.f32 %v1064, %v1158
    %v1160 = vpop.f32.mrb[0].mxu0
    %1161 = vmatprep.mubr.f32.mxu0 0.0
    %1162 = vmatmul.mubr.f32.gmra.mrb[0].mxu0 %v1082
    %v1163 = vpop.f32.mrb[0].mxu0
    %v1164 = vadd.f32 %v1068, %v1163
    %v1165 = vpop.f32.mrb[0].mxu0
    %1166 = vmatprep.mubr.f32.mxu0 0.0
    %1167 = vmatmul.mubr.f32.gmra.mrb[0].mxu0 %v1085
    %v1168 = vpop.f32.mrb[0].mxu0
    %v1169 = vadd.f32 %v1072, %v1168
    %v1170 = vpop.f32.mrb[0].mxu0
    %1171 = vdwg.mxu0
    %v1172 = vmul.f32 %v1154, 0.5
    %v1173 = vmul.f32 %v1159, 0.5
    %v1174 = vmul.f32 %v1164, 0.5
    %v1175 = vmul.f32 %v1169, 0.5
    %v1176 = vmul.f32 %v1154, 0.044715
    %v1177 = vmul.f32 %v1159, 0.044715
    %v1178 = vmul.f32 %v1164, 0.044715
    %v1179 = vmul.f32 %v1169, 0.044715
    %v1180 = vmul.f32 %v1176, %v1154
    %v1181 = vmul.f32 %v1177, %v1159
    %v1182 = vmul.f32 %v1178, %v1164
    %v1183 = vmul.f32 %v1179, %v1169
    %v1184 = vmul.f32 %v1180, %v1154
    %v1185 = vmul.f32 %v1181, %v1159
    %v1186 = vmul.f32 %v1182, %v1164
    %v1187 = vmul.f32 %v1183, %v1169
    %v1188 = vadd.f32 %v1154, %v1184
    %v1189 = vadd.f32 %v1159, %v1185
    %v1190 = vadd.f32 %v1164, %v1186
    %v1191 = vadd.f32 %v1169, %v1187
    %v1192 = vmul.f32 %v1188, 0.7978846
    %v1193 = vmul.f32 %v1189, 0.7978846
    %v1194 = vmul.f32 %v1190, 0.7978846
    %v1195 = vmul.f32 %v1191, 0.7978846
    %v1196 = vtanh.pop %v1192
    %v1197 = vtanh.pop %v1193
    %v1198 = vtanh.pop %v1194
    %v1199 = vtanh.pop %v1195
    %v1200 = vadd.f32 %v1196, 1.0
    %v1201 = vadd.f32 %v1197, 1.0
    %v1202 = vadd.f32 %v1198, 1.0
    %v1203 = vadd.f32 %v1199, 1.0
    %v1204 = vmul.f32 %v1172, %v1200
    %v1205 = vmul.f32 %v1173, %v1201
    %v1206 = vmul.f32 %v1174, %v1202
    %v1207 = vmul.f32 %v1175, %v1203
    %v1208 = vld [vmem:[%s4] sm:$0xff]
    %1209 = vset.pattern.permute.xlu0 5
    %1210 = vperm.xlu0 %1209, %v34
    %v1211 = vpop.permute.xlu0 %1210
    %vm1213 = vcmask 261120
    %v1215 = vsel %vm1213, %v1208, 0
    %1217 = vmatprep.subr.mxu0 0.0
    %1218 = vmatpush1.msra.mxu0 %v1204
    %1219 = vmatprep.subr.mxu0 0.0
    %1220 = vmatpush1.msra.mxu0 %v1205
    %1221 = vmatprep.subr.mxu0 0.0
    %1222 = vmatpush1.msra.mxu0 %v1206
    %1223 = vmatprep.subr.mxu0 0.0
    %1224 = vmatpush1.msra.mxu0 %v1207
    %1225 = vmatprep.subr.mxu0 0.0
    %1226 = vmatpush1.msra.mxu0 0.0
    %1227 = vmatprep.subr.mxu0 0.0
    %1228 = vmatpush1.msra.mxu0 0.0
    %1229 = vmatprep.subr.mxu0 0.0
    %1230 = vmatpush1.msra.mxu0 0.0
    %1231 = vmatprep.subr.mxu0 0.0
    %1232 = vmatpush1.msra.mxu0 0.0
    %1233 = vmatprep.subr.mxu0 0.0
    %1234 = vmatpush1.msra.mxu0 0.0
    %1235 = vmatprep.subr.mxu0 0.0
    %1236 = vmatpush1.msra.mxu0 0.0
    %1237 = vmatprep.subr.mxu0 0.0
    %1238 = vmatpush1.msra.mxu0 0.0
    %1239 = vmatprep.subr.mxu0 0.0
    %1240 = vmatpush1.msra.mxu0 0.0
    %1241 = vmatprep.subr.mxu0 0.0
    %1242 = vmatpush1.msra.mxu0 0.0
    %1243 = vmatprep.subr.mxu0 0.0
    %1244 = vmatpush1.msra.mxu0 0.0
    %1245 = vmatprep.subr.mxu0 0.0
    %1246 = vmatpush1.msra.mxu0 0.0
    %1247 = vmatprep.subr.mxu0 0.0
    %1248 = vmatpush1.msra.mxu0 0.0
    %1249 = vmatprep.subr.mxu0 0.0
    %1250 = vmatpush1.msra.mxu0 0.0
    %1251 = vmatprep.subr.mxu0 0.0
    %1252 = vmatpush1.msra.mxu0 0.0
    %1253 = vmatprep.subr.mxu0 0.0
    %1254 = vmatpush1.msra.mxu0 0.0
    %1255 = vmatprep.subr.mxu0 0.0
    %1256 = vmatpush1.msra.mxu0 0.0
    %1257 = vmatprep.subr.mxu0 0.0
    %1258 = vmatpush1.msra.mxu0 0.0
    %1259 = vmatprep.subr.mxu0 0.0
    %1260 = vmatpush1.msra.mxu0 0.0
    %1261 = vmatprep.subr.mxu0 0.0
    %1262 = vmatpush1.msra.mxu0 0.0
    %1263 = vmatprep.subr.mxu0 0.0
    %1264 = vmatpush1.msra.mxu0 0.0
    %1265 = vmatprep.subr.mxu0 0.0
    %1266 = vmatpush1.msra.mxu0 0.0
    %1267 = vmatprep.subr.mxu0 0.0
    %1268 = vmatpush1.msra.mxu0 0.0
    %1269 = vmatprep.subr.mxu0 0.0
    %1270 = vmatpush1.msra.mxu0 0.0
    %1271 = vmatprep.subr.mxu0 0.0
    %1272 = vmatpush1.msra.mxu0 0.0
    %1273 = vmatprep.subr.mxu0 0.0
    %1274 = vmatpush1.msra.mxu0 0.0
    %1275 = vmatprep.subr.mxu0 0.0
    %1276 = vmatpush1.msra.mxu0 0.0
    %1277 = vmatprep.subr.mxu0 0.0
    %1278 = vmatpush1.msra.mxu0 0.0
    %1279 = vmatprep.subr.mxu0 0.0
    %1280 = vmatpush1.msra.mxu0 0.0
    %1281 = vmatprep.mubr.f32.mxu0 0.0
    %1282 = vmatmul.mubr.f32.gmra.mrb[0].mxu0 %v1215
    %v1283 = vpop.f32.mrb[0].mxu0
    %v1284 = vadd.f32 %v1211, %v1283
    %v1285 = vpop.f32.mrb[0].mxu0
    %1286 = vdwg.mxu0
    %1287 = vst [vmem:[%s5] sm:$0xff] %v1284
    // Predicated region
    $region26: #{pretrained_cnn_forward.1} parent=1 // pred_check
      _
    $region27: #{pretrained_cnn_forward.1} parent=1 // pred_check_branch
      %1289 = sbr.rel (0) target = $region29
    $region28: #{pretrained_cnn_forward.1} parent=1 // pred_region
      _
    $region29: #{pretrained_cnn_forward.1} parent=1 // pred_fallthru
      _
    // Predicated region
    $region30: #{pretrained_cnn_forward.1} parent=1 // pred_check
      _
    $region31: #{pretrained_cnn_forward.1} parent=1 // pred_check_branch
      %1291 = sbr.rel (0) target = $region33
    $region32: #{pretrained_cnn_forward.1} parent=1 // pred_region
      _
    $region33: #{pretrained_cnn_forward.1} parent=1 // pred_fallthru
      _
    %1292 = vsyncpa [#allocation3], 1

</llo_original>
